<compile_context>
chip_gen: v7x
topology: tpu7x:2x2x1
jax: 0.10.0
libtpu: 0.0.40
codegen_flags: <defaults>
</compile_context>

<pallas_src>
import jax
import jax.numpy as jnp
from jax.experimental import pallas as pl
from jax.experimental.pallas import tpu as pltpu

EPS = 1e-5
NEG_SLOPE = 0.2
ALIGN = 256    # output-feature alignment: fills the 256-wide MXU (v6e/v7x),
               # multiple of 128 -> lane-dense unmasked stores, v5e-friendly
TN_CAP = 2048  # max output-feature tile; keeps triple-buffered W4 tiles well
               # inside v5e's 16 MiB default scoped VMEM


def _bn_lrelu(h, gamma, beta):
    """BatchNorm1d (training mode: batch mean, biased batch variance) folded
    into a single scale/shift, followed by LeakyReLU(0.2)."""
    mean = jnp.mean(h, axis=0, keepdims=True)
    d = h - mean
    var = jnp.mean(d * d, axis=0, keepdims=True)        # two-pass variance
    scale = gamma * jax.lax.rsqrt(var + EPS)
    hn = d * scale + beta
    return jnp.maximum(hn, NEG_SLOPE * hn)


def prologue_kernel(x_ref,
                    w1_ref, g1_ref, be1_ref,
                    w2_ref, g2_ref, be2_ref,
                    w3_ref, g3_ref, be3_ref,
                    h3_ref):
    """Layers 1-3 (Linear + BN(train) + LeakyReLU), fully resident, one step.
    Pre-BN biases are omitted: they cancel in the batch-mean subtraction."""
    h = jnp.dot(x_ref[...], w1_ref[...], preferred_element_type=jnp.float32)
    h = _bn_lrelu(h, g1_ref[...], be1_ref[...])
    h = jnp.dot(h.astype(jnp.bfloat16), w2_ref[...],
                preferred_element_type=jnp.float32)
    h = _bn_lrelu(h, g2_ref[...], be2_ref[...])
    h = jnp.dot(h.astype(jnp.bfloat16), w3_ref[...],
                preferred_element_type=jnp.float32)
    h = _bn_lrelu(h, g3_ref[...], be3_ref[...])
    h3_ref[...] = h                                      # f32 (B, 512)


def final_kernel(h3_ref, w4_ref, b4_ref, o_ref):
    """One lane-dense (B, tn) tile of Linear(512, N) + Sigmoid; W4 / b4 / out
    stream through the BlockSpec pipeline, h3 stays resident."""
    h3 = h3_ref[...].astype(jnp.bfloat16)
    y = jnp.dot(h3, w4_ref[...], preferred_element_type=jnp.float32)
    o_ref[...] = jax.nn.sigmoid(y + b4_ref[...])


def _choose_tile(image_size):
    """Largest 256-multiple <= TN_CAP that divides the 256-aligned width."""
    n_pad = ((image_size + ALIGN - 1) // ALIGN) * ALIGN
    tn = ALIGN
    cand = TN_CAP
    while cand >= ALIGN:
        if n_pad % cand == 0:
            tn = cand
            break
        cand -= ALIGN
    return tn, n_pad


def _w4_spec(tn, n_tiles):
    if n_tiles >= 3:
        try:
            return pl.BlockSpec((512, tn), lambda j: (0, j),
                                pipeline_mode=pl.Buffered(3))
        except TypeError:   # older jax without pipeline_mode kwarg
            pass
    return pl.BlockSpec((512, tn), lambda j: (0, j))


def generator_forward(x, params, c, w, h):
    """x: (B, latent_dim) f32. Returns (B, c, w, h) f32."""
    B = x.shape[0]
    image_size = c * w * h
    tn, n_pad = _choose_tile(image_size)
    n_tiles = n_pad // tn

    (W1, b1, g1, be1,
     W2, b2, g2, be2,
     W3, b3, g3, be3,
     W4, b4) = params
    del b1, b2, b3  # cancel exactly under training-mode BN

    # bf16 weights / activations for the MXU; BN stats & accumulation in f32.
    x_bf = x.astype(jnp.bfloat16)
    W1b = W1.astype(jnp.bfloat16)
    W2b = W2.astype(jnp.bfloat16)
    W3b = W3.astype(jnp.bfloat16)
    # Zero-pad final layer to the tile multiple (padding sliced off below).
    W4p = jnp.pad(W4, ((0, 0), (0, n_pad - image_size))).astype(jnp.bfloat16)
    b4p = jnp.pad(b4, ((0, 0), (0, n_pad - image_size)))

    # --- Stage 1: layers 1-3, tiny and fully resident (no grid) ------------
    h3 = pl.pallas_call(
        prologue_kernel,
        out_shape=jax.ShapeDtypeStruct((B, 512), jnp.float32),
    )(x_bf, W1b, g1, be1, W2b, g2, be2, W3b, g3, be3)

    # --- Stage 2: Linear(512, N) + Sigmoid, streamed over output tiles ------
    out2d = pl.pallas_call(
        final_kernel,
        out_shape=jax.ShapeDtypeStruct((B, n_pad), jnp.float32),
        grid=(n_tiles,),
        in_specs=[
            pl.BlockSpec((B, 512), lambda j: (0, 0)),   # h3: resident
            _w4_spec(tn, n_tiles),                      # W4: streamed tiles
            pl.BlockSpec((1, tn), lambda j: (0, j)),    # b4: streamed tiles
        ],
        out_specs=pl.BlockSpec((B, tn), lambda j: (0, j)),
        compiler_params=pltpu.CompilerParams(
            dimension_semantics=("parallel",),          # no cross-step carry
            vmem_limit_bytes=32 << 20),
    )(h3, W4p, b4p)

    # slice off lane padding, then y.view(-1, c, w, h)
    return out2d[:, :image_size].reshape(B, c, w, h)


def init_params(key, latent_dim, image_size):
    """Deterministic init matching the module's parameter shapes.
    Linear: U(-1/sqrt(fan_in), 1/sqrt(fan_in)); BatchNorm1d: gamma=1, beta=0."""
    dims = [latent_dim, 128, 256, 512, image_size]
    params = []
    keys = jax.random.split(key, 8)
    ki = 0
    for li in range(4):
        fan_in, fan_out = dims[li], dims[li + 1]
        bound = 1.0 / jnp.sqrt(jnp.float32(fan_in))
        W = jax.random.uniform(keys[ki], (fan_in, fan_out), jnp.float32,
                               -bound, bound)
        b = jax.random.uniform(keys[ki + 1], (1, fan_out), jnp.float32,
                               -bound, bound)
        ki += 2
        params.extend([W, b])
        if li < 3:  # BN params only for the first three blocks
            params.extend([jnp.ones((1, fan_out), jnp.float32),
                           jnp.zeros((1, fan_out), jnp.float32)])
    return params


def reference_forward(x, params):
    """Pure-JAX f32 reference of the PyTorch forward (training-mode BN)."""
    (W1, b1, g1, be1, W2, b2, g2, be2, W3, b3, g3, be3, W4, b4) = params

    def block(h, W, b, g, be):
        h = h @ W + b
        mean = h.mean(0, keepdims=True)
        var = ((h - mean) ** 2).mean(0, keepdims=True)
        h = (h - mean) / jnp.sqrt(var + EPS) * g + be
        return jnp.maximum(h, NEG_SLOPE * h)

    h = block(x, W1, b1, g1, be1)
    h = block(h, W2, b2, g2, be2)
    h = block(h, W3, b3, g3, be3)
    return jax.nn.sigmoid(h @ W4 + b4)


if __name__ == "__main__":
    # sample_x implies (N, c, w, h); pick small shapes
    B = 8            # batch (>1 required by BatchNorm1d batch statistics)
    c, w, h = 4, 16, 16
    latent_dim = 32
    image_size = c * w * h

    key = jax.random.PRNGKey(0)
    kx, kp = jax.random.split(key)
    x = jax.random.normal(kx, (B, latent_dim), jnp.float32)
    params = init_params(kp, latent_dim, image_size)

    y = generator_forward(x, params, c, w, h)
    y = jax.block_until_ready(y)

    assert y.shape == (B, c, w, h)
    assert bool(jnp.all(jnp.isfinite(y)))
    assert bool(jnp.all((y >= 0.0) & (y <= 1.0)))   # sigmoid output range

    y_ref = reference_forward(x, params).reshape(B, c, w, h)
    max_err = float(jnp.max(jnp.abs(y - y_ref)))
    assert max_err < 5e-2, f"max abs err vs f32 reference: {max_err}"
    print("KERNEL_OK")
</pallas_src>

<mosaic_0001>
module attributes {stable_mosaic.version = 11 : i64} {
  func.func @prologue_kernel(%arg0: memref<8x32xbf16, #tpu.memory_space<vmem>>, %arg1: memref<32x128xbf16, #tpu.memory_space<vmem>>, %arg2: memref<1x128xf32, #tpu.memory_space<vmem>>, %arg3: memref<1x128xf32, #tpu.memory_space<vmem>>, %arg4: memref<128x256xbf16, #tpu.memory_space<vmem>>, %arg5: memref<1x256xf32, #tpu.memory_space<vmem>>, %arg6: memref<1x256xf32, #tpu.memory_space<vmem>>, %arg7: memref<256x512xbf16, #tpu.memory_space<vmem>>, %arg8: memref<1x512xf32, #tpu.memory_space<vmem>>, %arg9: memref<1x512xf32, #tpu.memory_space<vmem>>, %arg10: memref<8x512xf32, #tpu.memory_space<vmem>>) attributes {dimension_semantics = [], scalar_prefetch = 0 : i64, scratch_operands = 0 : i64, tpu.core_type = #tpu.core_type<tc>} {
    %c0 = arith.constant 0 : index
    %c0_0 = arith.constant 0 : index
    %0 = vector.load %arg0[%c0, %c0_0] : memref<8x32xbf16, #tpu.memory_space<vmem>>, vector<8x32xbf16>
    %c0_1 = arith.constant 0 : index
    %c0_2 = arith.constant 0 : index
    %1 = vector.load %arg1[%c0_1, %c0_2] : memref<32x128xbf16, #tpu.memory_space<vmem>>, vector<32x128xbf16>
    %cst = arith.constant dense<0.000000e+00> : vector<8x128xf32>
    %2 = tpu.matmul %0, %1, %cst {dimension_numbers = #tpu.dot_dimension_numbers<[1], [0], [0], [1], [0, 0, 1, 1], [], []>} : vector<8x32xbf16>, vector<32x128xbf16>, vector<8x128xf32> -> vector<8x128xf32>
    %c0_3 = arith.constant 0 : index
    %c0_4 = arith.constant 0 : index
    %3 = vector.load %arg2[%c0_3, %c0_4] : memref<1x128xf32, #tpu.memory_space<vmem>>, vector<1x128xf32>
    %c0_5 = arith.constant 0 : index
    %c0_6 = arith.constant 0 : index
    %4 = vector.load %arg3[%c0_5, %c0_6] : memref<1x128xf32, #tpu.memory_space<vmem>>, vector<1x128xf32>
    %cst_7 = arith.constant dense<0.000000e+00> : vector<128xf32>
    %5 = vector.multi_reduction <add>, %2, %cst_7 [0] : vector<8x128xf32> to vector<128xf32>
    %6 = vector.shape_cast %5 : vector<128xf32> to vector<1x128xf32>
    %cst_8 = arith.constant 8.000000e+00 : f32
    %7 = vector.broadcast %cst_8 : f32 to vector<1x128xf32>
    %8 = arith.divf %6, %7 : vector<1x128xf32>
    %9 = vector.broadcast %8 : vector<1x128xf32> to vector<8x128xf32>
    %10 = arith.subf %2, %9 : vector<8x128xf32>
    %11 = arith.mulf %10, %10 : vector<8x128xf32>
    %cst_9 = arith.constant dense<0.000000e+00> : vector<128xf32>
    %12 = vector.multi_reduction <add>, %11, %cst_9 [0] : vector<8x128xf32> to vector<128xf32>
    %13 = vector.shape_cast %12 : vector<128xf32> to vector<1x128xf32>
    %cst_10 = arith.constant 8.000000e+00 : f32
    %14 = vector.broadcast %cst_10 : f32 to vector<1x128xf32>
    %15 = arith.divf %13, %14 : vector<1x128xf32>
    %cst_11 = arith.constant 9.99999974E-6 : f32
    %16 = vector.broadcast %cst_11 : f32 to vector<1x128xf32>
    %17 = arith.addf %15, %16 : vector<1x128xf32>
    %18 = math.rsqrt %17 : vector<1x128xf32>
    %19 = arith.mulf %3, %18 : vector<1x128xf32>
    %20 = vector.broadcast %19 : vector<1x128xf32> to vector<8x128xf32>
    %21 = arith.mulf %10, %20 : vector<8x128xf32>
    %22 = vector.broadcast %4 : vector<1x128xf32> to vector<8x128xf32>
    %23 = arith.addf %21, %22 : vector<8x128xf32>
    %cst_12 = arith.constant 2.000000e-01 : f32
    %24 = vector.broadcast %cst_12 : f32 to vector<8x128xf32>
    %25 = arith.mulf %24, %23 : vector<8x128xf32>
    %26 = arith.maximumf %23, %25 : vector<8x128xf32>
    %27 = arith.truncf %26 : vector<8x128xf32> to vector<8x128xbf16>
    %c0_13 = arith.constant 0 : index
    %c0_14 = arith.constant 0 : index
    %28 = vector.load %arg4[%c0_13, %c0_14] : memref<128x256xbf16, #tpu.memory_space<vmem>>, vector<128x256xbf16>
    %cst_15 = arith.constant dense<0.000000e+00> : vector<8x256xf32>
    %29 = tpu.matmul %27, %28, %cst_15 {dimension_numbers = #tpu.dot_dimension_numbers<[1], [0], [0], [1], [0, 0, 1, 1], [], []>} : vector<8x128xbf16>, vector<128x256xbf16>, vector<8x256xf32> -> vector<8x256xf32>
    %c0_16 = arith.constant 0 : index
    %c0_17 = arith.constant 0 : index
    %30 = vector.load %arg5[%c0_16, %c0_17] : memref<1x256xf32, #tpu.memory_space<vmem>>, vector<1x256xf32>
    %c0_18 = arith.constant 0 : index
    %c0_19 = arith.constant 0 : index
    %31 = vector.load %arg6[%c0_18, %c0_19] : memref<1x256xf32, #tpu.memory_space<vmem>>, vector<1x256xf32>
    %cst_20 = arith.constant dense<0.000000e+00> : vector<256xf32>
    %32 = vector.multi_reduction <add>, %29, %cst_20 [0] : vector<8x256xf32> to vector<256xf32>
    %33 = vector.shape_cast %32 : vector<256xf32> to vector<1x256xf32>
    %cst_21 = arith.constant 8.000000e+00 : f32
    %34 = vector.broadcast %cst_21 : f32 to vector<1x256xf32>
    %35 = arith.divf %33, %34 : vector<1x256xf32>
    %36 = vector.broadcast %35 : vector<1x256xf32> to vector<8x256xf32>
    %37 = arith.subf %29, %36 : vector<8x256xf32>
    %38 = arith.mulf %37, %37 : vector<8x256xf32>
    %cst_22 = arith.constant dense<0.000000e+00> : vector<256xf32>
    %39 = vector.multi_reduction <add>, %38, %cst_22 [0] : vector<8x256xf32> to vector<256xf32>
    %40 = vector.shape_cast %39 : vector<256xf32> to vector<1x256xf32>
    %cst_23 = arith.constant 8.000000e+00 : f32
    %41 = vector.broadcast %cst_23 : f32 to vector<1x256xf32>
    %42 = arith.divf %40, %41 : vector<1x256xf32>
    %cst_24 = arith.constant 9.99999974E-6 : f32
    %43 = vector.broadcast %cst_24 : f32 to vector<1x256xf32>
    %44 = arith.addf %42, %43 : vector<1x256xf32>
    %45 = math.rsqrt %44 : vector<1x256xf32>
    %46 = arith.mulf %30, %45 : vector<1x256xf32>
    %47 = vector.broadcast %46 : vector<1x256xf32> to vector<8x256xf32>
    %48 = arith.mulf %37, %47 : vector<8x256xf32>
    %49 = vector.broadcast %31 : vector<1x256xf32> to vector<8x256xf32>
    %50 = arith.addf %48, %49 : vector<8x256xf32>
    %cst_25 = arith.constant 2.000000e-01 : f32
    %51 = vector.broadcast %cst_25 : f32 to vector<8x256xf32>
    %52 = arith.mulf %51, %50 : vector<8x256xf32>
    %53 = arith.maximumf %50, %52 : vector<8x256xf32>
    %54 = arith.truncf %53 : vector<8x256xf32> to vector<8x256xbf16>
    %c0_26 = arith.constant 0 : index
    %c0_27 = arith.constant 0 : index
    %55 = vector.load %arg7[%c0_26, %c0_27] : memref<256x512xbf16, #tpu.memory_space<vmem>>, vector<256x512xbf16>
    %cst_28 = arith.constant dense<0.000000e+00> : vector<8x512xf32>
    %56 = tpu.matmul %54, %55, %cst_28 {dimension_numbers = #tpu.dot_dimension_numbers<[1], [0], [0], [1], [0, 0, 1, 1], [], []>} : vector<8x256xbf16>, vector<256x512xbf16>, vector<8x512xf32> -> vector<8x512xf32>
    %c0_29 = arith.constant 0 : index
    %c0_30 = arith.constant 0 : index
    %57 = vector.load %arg8[%c0_29, %c0_30] : memref<1x512xf32, #tpu.memory_space<vmem>>, vector<1x512xf32>
    %c0_31 = arith.constant 0 : index
    %c0_32 = arith.constant 0 : index
    %58 = vector.load %arg9[%c0_31, %c0_32] : memref<1x512xf32, #tpu.memory_space<vmem>>, vector<1x512xf32>
    %cst_33 = arith.constant dense<0.000000e+00> : vector<512xf32>
    %59 = vector.multi_reduction <add>, %56, %cst_33 [0] : vector<8x512xf32> to vector<512xf32>
    %60 = vector.shape_cast %59 : vector<512xf32> to vector<1x512xf32>
    %cst_34 = arith.constant 8.000000e+00 : f32
    %61 = vector.broadcast %cst_34 : f32 to vector<1x512xf32>
    %62 = arith.divf %60, %61 : vector<1x512xf32>
    %63 = vector.broadcast %62 : vector<1x512xf32> to vector<8x512xf32>
    %64 = arith.subf %56, %63 : vector<8x512xf32>
    %65 = arith.mulf %64, %64 : vector<8x512xf32>
    %cst_35 = arith.constant dense<0.000000e+00> : vector<512xf32>
    %66 = vector.multi_reduction <add>, %65, %cst_35 [0] : vector<8x512xf32> to vector<512xf32>
    %67 = vector.shape_cast %66 : vector<512xf32> to vector<1x512xf32>
    %cst_36 = arith.constant 8.000000e+00 : f32
    %68 = vector.broadcast %cst_36 : f32 to vector<1x512xf32>
    %69 = arith.divf %67, %68 : vector<1x512xf32>
    %cst_37 = arith.constant 9.99999974E-6 : f32
    %70 = vector.broadcast %cst_37 : f32 to vector<1x512xf32>
    %71 = arith.addf %69, %70 : vector<1x512xf32>
    %72 = math.rsqrt %71 : vector<1x512xf32>
    %73 = arith.mulf %57, %72 : vector<1x512xf32>
    %74 = vector.broadcast %73 : vector<1x512xf32> to vector<8x512xf32>
    %75 = arith.mulf %64, %74 : vector<8x512xf32>
    %76 = vector.broadcast %58 : vector<1x512xf32> to vector<8x512xf32>
    %77 = arith.addf %75, %76 : vector<8x512xf32>
    %cst_38 = arith.constant 2.000000e-01 : f32
    %78 = vector.broadcast %cst_38 : f32 to vector<8x512xf32>
    %79 = arith.mulf %78, %77 : vector<8x512xf32>
    %80 = arith.maximumf %77, %79 : vector<8x512xf32>
    %c0_39 = arith.constant 0 : index
    %c0_40 = arith.constant 0 : index
    %81 = vector.load %arg10[%c0_39, %c0_40] : memref<8x512xf32, #tpu.memory_space<vmem>>, vector<8x512xf32>
    tpu.vector_store %arg10[%c0_39, %c0_40], %80 {strides = array<i32>} : memref<8x512xf32, #tpu.memory_space<vmem>>, vector<8x512xf32>,
    return
  }
}

</mosaic_0001>

<llo_original>
// kernel: tpu_custom_call.1
$region0: #{tpu_custom_call.1}
  #allocation0 [shape = 'u32[]', space=smem, size = 0x4, offset = 0x4, fixed_abs, tag = 'smem constant byte address 0x4 - core index']
  #allocation1 [shape = 'u32[144,128]{1,0:T(1,128)}', space=vmem, size = 0x12000, scoped, tag = 'internal scratch']
  %s0 = inlined_call_operand.hbm [shape: bf16[8,32], index: 0, kind: input, shape index: {}]
  %s1 = inlined_call_operand.hbm [shape: bf16[32,128], index: 1, kind: input, shape index: {}]
  %s2 = inlined_call_operand.vmem [shape: f32[1,128], index: 2, kind: input, shape index: {}]
  %s3 = inlined_call_operand.hbm [shape: f32[1,128], index: 3, kind: input, shape index: {}]
  %s4 = inlined_call_operand.hbm [shape: bf16[128,256], index: 4, kind: input, shape index: {}]
  %s5 = inlined_call_operand.vmem [shape: f32[1,256], index: 5, kind: input, shape index: {}]
  %s6 = inlined_call_operand.vmem [shape: f32[1,256], index: 6, kind: input, shape index: {}]
  %s7 = inlined_call_operand.hbm [shape: bf16[256,512], index: 7, kind: input, shape index: {}]
  %s8 = inlined_call_operand.vmem [shape: f32[1,512], index: 8, kind: input, shape index: {}]
  %s9 = inlined_call_operand.vmem [shape: f32[1,512], index: 9, kind: input, shape index: {}]
  %s10 = inlined_call_operand.hbm [shape: f32[8,512], index: 10, kind: output, shape index: {}]
  %s11 = sld [smem:[#allocation0]]
  $region70: #{tpu_custom_call.1} parent=0
    _
  %s13 = ssub.s32 1, %s11
  %s14 = scalar_select 0, %s13, %s11
  $region1: #{tpu_custom_call.1} parent=0
    #allocation2 [shape = 'u8[2048]{0}', space=vmem, size = 0x800, scoped, tag = 'input window, operand 0, single buffered']
    #allocation3 [shape = 's32[1]{0}', space=sflag, size = 0x4, scoped, tag = 'scoped memory for tpu_custom_call.1']
    #allocation4 [shape = 's32[1]{0}', space=sflag, size = 0x4, scoped, tag = 'scoped memory for tpu_custom_call.1']
    #allocation5 [shape = 'u8[8192]{0}', space=vmem, size = 0x2000, scoped, tag = 'input window, operand 1, single buffered']
    #allocation6 [shape = 's32[1]{0}', space=sflag, size = 0x4, scoped, tag = 'scoped memory for tpu_custom_call.1']
    #allocation7 [shape = 'u8[512]{0}', space=vmem, size = 0x400, scoped, tag = 'input window, operand 3, single buffered']
    #allocation8 [shape = 'u8[65536]{0}', space=vmem, size = 0x10000, scoped, tag = 'input window, operand 4, single buffered']
    #allocation9 [shape = 's32[1]{0}', space=sflag, size = 0x4, scoped, tag = 'scoped memory for tpu_custom_call.1']
    #allocation10 [shape = 'u8[262144]{0}', space=vmem, size = 0x40000, scoped, tag = 'input window, operand 7, single buffered']
    #allocation11 [shape = 'u8[16384]{0}', space=vmem, size = 0x4000, scoped, tag = 'output window, operand 0, single buffered']
    %15 = vsyncpa [#allocation3], 0
    %16 = vsyncpa [#allocation6], 0
    %17 = vsyncpa [#allocation9], 0
    %18 = vsyncpa [#allocation4], 0
    // Predicated region
    $region2: #{tpu_custom_call.1} parent=1 // pred_check
      _
    $region3: #{tpu_custom_call.1} parent=1 // pred_check_branch
      %20 = sbr.rel (0) target = $region5
    $region4: #{tpu_custom_call.1} parent=1 // pred_region
      %s22 = ssub.s32 64, 64
      %23 = vsyncadd [#allocation3], %s22
      %s25 = sshll.u32 [#allocation2], 4
      %s26 = int_to_ptr.vmem [resolvable:$true] %s25
      %28 = dma.hbm_to_vmem [thread:$0]  %s0, 64, %s26, [#allocation3]
    $region5: #{tpu_custom_call.1} parent=1 // pred_fallthru
      _
    // Predicated region
    $region6: #{tpu_custom_call.1} parent=1 // pred_check
      _
    $region7: #{tpu_custom_call.1} parent=1 // pred_check_branch
      %30 = sbr.rel (0) target = $region9
    $region8: #{tpu_custom_call.1} parent=1 // pred_region
      %s32 = ssub.s32 256, 256
      %33 = vsyncadd [#allocation6], %s32
      %s34 = sshll.u32 [#allocation5], 4
      %s35 = int_to_ptr.vmem [resolvable:$true] %s34
      %40 = dma.hbm_to_vmem [thread:$0]  %s1, 256, %s35, [#allocation6], 64, 64, 4
    $region9: #{tpu_custom_call.1} parent=1 // pred_fallthru
      _
    // Predicated region
    $region10: #{tpu_custom_call.1} parent=1 // pred_check
      _
    $region11: #{tpu_custom_call.1} parent=1 // pred_check_branch
      %42 = sbr.rel (0) target = $region13
    $region12: #{tpu_custom_call.1} parent=1 // pred_region
      _
    $region13: #{tpu_custom_call.1} parent=1 // pred_fallthru
      _
    // Predicated region
    $region14: #{tpu_custom_call.1} parent=1 // pred_check
      _
    $region15: #{tpu_custom_call.1} parent=1 // pred_check_branch
      %44 = sbr.rel (0) target = $region17
    $region16: #{tpu_custom_call.1} parent=1 // pred_region
      %s46 = ssub.s32 16, 16
      %47 = vsyncadd [#allocation6], %s46
      %s49 = sshll.u32 [#allocation7], 4
      %s50 = int_to_ptr.vmem [resolvable:$true] %s49
      %52 = dma.hbm_to_vmem [thread:$0]  %s3, 16, %s50, [#allocation6]
    $region17: #{tpu_custom_call.1} parent=1 // pred_fallthru
      _
    // Predicated region
    $region18: #{tpu_custom_call.1} parent=1 // pred_check
      _
    $region19: #{tpu_custom_call.1} parent=1 // pred_check_branch
      %54 = sbr.rel (0) target = $region21
    $region20: #{tpu_custom_call.1} parent=1 // pred_region
      %s56 = ssub.s32 2048, 2048
      %57 = vsyncadd [#allocation9], %s56
      %s58 = sshll.u32 [#allocation8], 4
      %s59 = int_to_ptr.vmem [resolvable:$true] %s58
      %64 = dma.hbm_to_vmem [thread:$0]  %s4, 2048, %s59, [#allocation9], 128, 128, 8
    $region21: #{tpu_custom_call.1} parent=1 // pred_fallthru
      _
    // Predicated region
    $region22: #{tpu_custom_call.1} parent=1 // pred_check
      _
    $region23: #{tpu_custom_call.1} parent=1 // pred_check_branch
      %66 = sbr.rel (0) target = $region25
    $region24: #{tpu_custom_call.1} parent=1 // pred_region
      _
    $region25: #{tpu_custom_call.1} parent=1 // pred_fallthru
      _
    // Predicated region
    $region26: #{tpu_custom_call.1} parent=1 // pred_check
      _
    $region27: #{tpu_custom_call.1} parent=1 // pred_check_branch
      %68 = sbr.rel (0) target = $region29
    $region28: #{tpu_custom_call.1} parent=1 // pred_region
      _
    $region29: #{tpu_custom_call.1} parent=1 // pred_fallthru
      _
    // Predicated region
    $region30: #{tpu_custom_call.1} parent=1 // pred_check
      _
    $region31: #{tpu_custom_call.1} parent=1 // pred_check_branch
      %70 = sbr.rel (0) target = $region33
    $region32: #{tpu_custom_call.1} parent=1 // pred_region
      %s72 = ssub.s32 8192, 8192
      %73 = vsyncadd [#allocation9], %s72
      %s74 = sshll.u32 [#allocation10], 4
      %s75 = int_to_ptr.vmem [resolvable:$true] %s74
      %80 = dma.hbm_to_vmem [thread:$0]  %s7, 8192, %s75, [#allocation9], 256, 256, 16
    $region33: #{tpu_custom_call.1} parent=1 // pred_fallthru
      _
    // Predicated region
    $region34: #{tpu_custom_call.1} parent=1 // pred_check
      _
    $region35: #{tpu_custom_call.1} parent=1 // pred_check_branch
      %82 = sbr.rel (0) target = $region37
    $region36: #{tpu_custom_call.1} parent=1 // pred_region
      _
    $region37: #{tpu_custom_call.1} parent=1 // pred_fallthru
      _
    // Predicated region
    $region38: #{tpu_custom_call.1} parent=1 // pred_check
      _
    $region39: #{tpu_custom_call.1} parent=1 // pred_check_branch
      %84 = sbr.rel (0) target = $region41
    $region40: #{tpu_custom_call.1} parent=1 // pred_region
      _
    $region41: #{tpu_custom_call.1} parent=1 // pred_fallthru
      _
    // Predicated region
    $region42: #{tpu_custom_call.1} parent=1 // pred_check
      _
    $region43: #{tpu_custom_call.1} parent=1 // pred_check_branch
      %86 = sbr.rel (0) target = $region45
    $region44: #{tpu_custom_call.1} parent=1 // pred_region
      %87 = dma.done [#allocation3], 64
    $region45: #{tpu_custom_call.1} parent=1 // pred_fallthru
      _
    // Predicated region
    $region46: #{tpu_custom_call.1} parent=1 // pred_check
      _
    $region47: #{tpu_custom_call.1} parent=1 // pred_check_branch
      %89 = sbr.rel (0) target = $region49
    $region48: #{tpu_custom_call.1} parent=1 // pred_region
      %90 = dma.done [#allocation6], 256
    $region49: #{tpu_custom_call.1} parent=1 // pred_fallthru
      _
    // Predicated region
    $region50: #{tpu_custom_call.1} parent=1 // pred_check
      _
    $region51: #{tpu_custom_call.1} parent=1 // pred_check_branch
      %92 = sbr.rel (0) target = $region53
    $region52: #{tpu_custom_call.1} parent=1 // pred_region
      %93 = dma.done [#allocation6], 16
    $region53: #{tpu_custom_call.1} parent=1 // pred_fallthru
      _
    // Predicated region
    $region54: #{tpu_custom_call.1} parent=1 // pred_check
      _
    $region55: #{tpu_custom_call.1} parent=1 // pred_check_branch
      %95 = sbr.rel (0) target = $region57
    $region56: #{tpu_custom_call.1} parent=1 // pred_region
      %96 = dma.done [#allocation9], 2048
    $region57: #{tpu_custom_call.1} parent=1 // pred_fallthru
      _
    // Predicated region
    $region58: #{tpu_custom_call.1} parent=1 // pred_check
      _
    $region59: #{tpu_custom_call.1} parent=1 // pred_check_branch
      %98 = sbr.rel (0) target = $region61
    $region60: #{tpu_custom_call.1} parent=1 // pred_region
      %99 = dma.done [#allocation9], 8192
    $region61: #{tpu_custom_call.1} parent=1 // pred_fallthru
      _
    %v101 = vld [vmem:[#allocation2] sm:$0xf]
    %v102 = vld [vmem:[#allocation5] sm:$0xf]
    %v103 = vld [vmem:[#allocation5 + $0x4] sm:$0xf]
    %v104 = vld [vmem:[#allocation5 + $0x8] sm:$0xf]
    %v105 = vld [vmem:[#allocation5 + $0xc] sm:$0xf]
    %v110 = vunpack.c.l.b16 %v102
    %v111 = vunpack.c.l.b16 %v103
    %v112 = vunpack.c.l.b16 %v104
    %v113 = vunpack.c.l.b16 %v105
    %v114 = vpack.c.b16 %v111, %v110
    %v115 = vpack.c.b16 %v113, %v112
    %vm118 = vcmask 261120
    %v120 = vsel %vm118, %v101, 0
    %122 = vmatprep.subr.bf16.mxu0 0
    %123 = vmatpush1.bf16.msra.mxu0 %v114
    %124 = vmatprep.subr.bf16.mxu0 0
    %125 = vmatpush1.bf16.msra.mxu0 %v115
    %126 = vmatprep.subr.bf16.mxu0 0
    %127 = vmatpush1.bf16.msra.mxu0 0
    %128 = vmatprep.subr.bf16.mxu0 0
    %129 = vmatpush1.bf16.msra.mxu0 0
    %130 = vmatprep.subr.bf16.mxu0 0
    %131 = vmatpush1.bf16.msra.mxu0 0
    %132 = vmatprep.subr.bf16.mxu0 0
    %133 = vmatpush1.bf16.msra.mxu0 0
    %134 = vmatprep.subr.bf16.mxu0 0
    %135 = vmatpush1.bf16.msra.mxu0 0
    %136 = vmatprep.subr.bf16.mxu0 0
    %137 = vmatpush1.bf16.msra.mxu0 0
    %138 = vmatprep.subr.bf16.mxu0 0
    %139 = vmatpush1.bf16.msra.mxu0 0
    %140 = vmatprep.subr.bf16.mxu0 0
    %141 = vmatpush1.bf16.msra.mxu0 0
    %142 = vmatprep.subr.bf16.mxu0 0
    %143 = vmatpush1.bf16.msra.mxu0 0
    %144 = vmatprep.subr.bf16.mxu0 0
    %145 = vmatpush1.bf16.msra.mxu0 0
    %146 = vmatprep.subr.bf16.mxu0 0
    %147 = vmatpush1.bf16.msra.mxu0 0
    %148 = vmatprep.subr.bf16.mxu0 0
    %149 = vmatpush1.bf16.msra.mxu0 0
    %150 = vmatprep.subr.bf16.mxu0 0
    %151 = vmatpush1.bf16.msra.mxu0 0
    %152 = vmatprep.subr.bf16.mxu0 0
    %153 = vmatpush1.bf16.msra.mxu0 0
    %154 = vmatprep.mubr.bf16.mxu0 0
    %155 = vmatmul.mubr.bf16.gmra.mrb[0].mxu0 %v120
    %v156 = vpop.f32.mrb[0].mxu0
    %v157 = vadd.f32 0.0, %v156
    %v158 = vpop.f32.mrb[0].mxu0
    %v159 = vpop.f32.mrb[0].mxu0
    %v160 = vpop.f32.mrb[0].mxu0
    %161 = vdwg.mxu0
    %v162 = vld [vmem:[%s2] sm:$0x1]
    %v163 = vld [vmem:[#allocation7] sm:$0x1]
    %v164 = vrot.slane %v157, 4
    %v165 = vadd.f32 %v157, %v164
    %v166 = vrot.slane %v165, 2
    %v167 = vadd.f32 %v165, %v166
    %v168 = vrot.slane %v167, 1
    %v169 = vadd.f32 %v167, %v168
    %v170 = vrcp.pop 8.0
    %v171 = vmul.f32 %v169, %v170
    %v172 = vsub.f32 %v157, %v171
    %v173 = vmul.f32 %v172, %v172
    %v174 = vrot.slane %v173, 4
    %v175 = vadd.f32 %v173, %v174
    %v176 = vrot.slane %v175, 2
    %v177 = vadd.f32 %v175, %v176
    %v178 = vrot.slane %v177, 1
    %v179 = vadd.f32 %v177, %v178
    %v180 = vmul.f32 %v179, %v170
    %v181 = vadd.f32 %v180, 1e-05
    %v182 = vrsqrt.pop %v181
    %v183 = vmul.f32 %v162, %v182
    %v185 = vlaneseq
    %v186 = vshrl.u32 %v185, 7
    %v187 = vsub.s32 0, %v186
    %v188 = vrot.slane %v183, %v187
    %v190 = vmul.f32 %v172, %v188
    %v192 = vlaneseq
    %v193 = vshrl.u32 %v192, 7
    %v194 = vsub.s32 0, %v193
    %v195 = vrot.slane %v163, %v194
    %v197 = vadd.f32 %v190, %v195
    %v198 = vmul.f32 %v197, 0.2
    %v199 = vmax.f32 %v197, %v198
    %v200 = vpack.c.bf16 %v199, %v199
    %v201 = vld [vmem:[#allocation8] sm:$0xff]
    %v202 = vld [vmem:[#allocation8 + $0x8] sm:$0xff]
    %v203 = vld [vmem:[#allocation8 + $0x10] sm:$0xff]
    %v204 = vld [vmem:[#allocation8 + $0x18] sm:$0xff]
    %v205 = vld [vmem:[#allocation8 + $0x20] sm:$0xff]
    %v206 = vld [vmem:[#allocation8 + $0x28] sm:$0xff]
    %v207 = vld [vmem:[#allocation8 + $0x30] sm:$0xff]
    %v208 = vld [vmem:[#allocation8 + $0x38] sm:$0xff]
    %v209 = vld [vmem:[#allocation8 + $0x40] sm:$0xff]
    %v210 = vld [vmem:[#allocation8 + $0x48] sm:$0xff]
    %v211 = vld [vmem:[#allocation8 + $0x50] sm:$0xff]
    %v212 = vld [vmem:[#allocation8 + $0x58] sm:$0xff]
    %v213 = vld [vmem:[#allocation8 + $0x60] sm:$0xff]
    %v214 = vld [vmem:[#allocation8 + $0x68] sm:$0xff]
    %v215 = vld [vmem:[#allocation8 + $0x70] sm:$0xff]
    %v216 = vld [vmem:[#allocation8 + $0x78] sm:$0xff]
    %v233 = vunpack.c.l.b16 %v201
    %v234 = vunpack.c.h.b16 %v201
    %v235 = vunpack.c.l.b16 %v202
    %v236 = vunpack.c.h.b16 %v202
    %v237 = vunpack.c.l.b16 %v203
    %v238 = vunpack.c.h.b16 %v203
    %v239 = vunpack.c.l.b16 %v204
    %v240 = vunpack.c.h.b16 %v204
    %v241 = vunpack.c.l.b16 %v205
    %v242 = vunpack.c.h.b16 %v205
    %v243 = vunpack.c.l.b16 %v206
    %v244 = vunpack.c.h.b16 %v206
    %v245 = vunpack.c.l.b16 %v207
    %v246 = vunpack.c.h.b16 %v207
    %v247 = vunpack.c.l.b16 %v208
    %v248 = vunpack.c.h.b16 %v208
    %v249 = vunpack.c.l.b16 %v209
    %v250 = vunpack.c.h.b16 %v209
    %v251 = vunpack.c.l.b16 %v210
    %v252 = vunpack.c.h.b16 %v210
    %v253 = vunpack.c.l.b16 %v211
    %v254 = vunpack.c.h.b16 %v211
    %v255 = vunpack.c.l.b16 %v212
    %v256 = vunpack.c.h.b16 %v212
    %v257 = vunpack.c.l.b16 %v213
    %v258 = vunpack.c.h.b16 %v213
    %v259 = vunpack.c.l.b16 %v214
    %v260 = vunpack.c.h.b16 %v214
    %v261 = vunpack.c.l.b16 %v215
    %v262 = vunpack.c.h.b16 %v215
    %v263 = vunpack.c.l.b16 %v216
    %v264 = vunpack.c.h.b16 %v216
    %v265 = vpack.c.b16 %v235, %v233
    %v266 = vpack.c.b16 %v236, %v234
    %v267 = vpack.c.b16 %v239, %v237
    %v268 = vpack.c.b16 %v240, %v238
    %v269 = vpack.c.b16 %v243, %v241
    %v270 = vpack.c.b16 %v244, %v242
    %v271 = vpack.c.b16 %v247, %v245
    %v272 = vpack.c.b16 %v248, %v246
    %v273 = vpack.c.b16 %v251, %v249
    %v274 = vpack.c.b16 %v252, %v250
    %v275 = vpack.c.b16 %v255, %v253
    %v276 = vpack.c.b16 %v256, %v254
    %v277 = vpack.c.b16 %v259, %v257
    %v278 = vpack.c.b16 %v260, %v258
    %v279 = vpack.c.b16 %v263, %v261
    %v280 = vpack.c.b16 %v264, %v262
    %297 = vmatprep.subr.bf16.mxu0 %v266
    %298 = vmatpush1.bf16.msra.mxu0 %v265
    %299 = vmatprep.subr.bf16.mxu0 %v268
    %300 = vmatpush1.bf16.msra.mxu0 %v267
    %301 = vmatprep.subr.bf16.mxu0 %v270
    %302 = vmatpush1.bf16.msra.mxu0 %v269
    %303 = vmatprep.subr.bf16.mxu0 %v272
    %304 = vmatpush1.bf16.msra.mxu0 %v271
    %305 = vmatprep.subr.bf16.mxu0 %v274
    %306 = vmatpush1.bf16.msra.mxu0 %v273
    %307 = vmatprep.subr.bf16.mxu0 %v276
    %308 = vmatpush1.bf16.msra.mxu0 %v275
    %309 = vmatprep.subr.bf16.mxu0 %v278
    %310 = vmatpush1.bf16.msra.mxu0 %v277
    %311 = vmatprep.subr.bf16.mxu0 %v280
    %312 = vmatpush1.bf16.msra.mxu0 %v279
    %313 = vmatprep.subr.bf16.mxu0 0
    %314 = vmatpush1.bf16.msra.mxu0 0
    %315 = vmatprep.subr.bf16.mxu0 0
    %316 = vmatpush1.bf16.msra.mxu0 0
    %317 = vmatprep.subr.bf16.mxu0 0
    %318 = vmatpush1.bf16.msra.mxu0 0
    %319 = vmatprep.subr.bf16.mxu0 0
    %320 = vmatpush1.bf16.msra.mxu0 0
    %321 = vmatprep.subr.bf16.mxu0 0
    %322 = vmatpush1.bf16.msra.mxu0 0
    %323 = vmatprep.subr.bf16.mxu0 0
    %324 = vmatpush1.bf16.msra.mxu0 0
    %325 = vmatprep.subr.bf16.mxu0 0
    %326 = vmatpush1.bf16.msra.mxu0 0
    %327 = vmatprep.subr.bf16.mxu0 0
    %328 = vmatpush1.bf16.msra.mxu0 0
    %329 = vmatprep.mubr.bf16.mxu0 0
    %330 = vmatmul.mubr.bf16.gmra.mrb[0].mxu0 %v200
    %v331 = vpop.f32.mrb[0].mxu0
    %v332 = vadd.f32 0.0, %v331
    %v333 = vpop.f32.mrb[0].mxu0
    %v334 = vadd.f32 0.0, %v333
    %v335 = vpop.f32.mrb[0].mxu0
    %v336 = vpop.f32.mrb[0].mxu0
    %337 = vdwg.mxu0
    %v338 = vld [vmem:[%s5] sm:$0x3]
    %v339 = vld [vmem:[%s6] sm:$0x3]
    %v340 = vrot.slane %v332, 4
    %v341 = vadd.f32 %v332, %v340
    %v342 = vrot.slane %v341, 2
    %v343 = vadd.f32 %v341, %v342
    %v344 = vrot.slane %v343, 1
    %v345 = vadd.f32 %v343, %v344
    %v346 = vrot.slane %v334, 4
    %v347 = vadd.f32 %v334, %v346
    %v348 = vrot.slane %v347, 2
    %v349 = vadd.f32 %v347, %v348
    %v350 = vrot.slane %v349, 1
    %v351 = vadd.f32 %v349, %v350
    %v352 = vmul.f32 %v345, %v170
    %v353 = vmul.f32 %v351, %v170
    %v354 = vsub.f32 %v332, %v352
    %v355 = vsub.f32 %v334, %v353
    %v356 = vmul.f32 %v354, %v354
    %v357 = vmul.f32 %v355, %v355
    %v358 = vrot.slane %v356, 4
    %v359 = vadd.f32 %v356, %v358
    %v360 = vrot.slane %v359, 2
    %v361 = vadd.f32 %v359, %v360
    %v362 = vrot.slane %v361, 1
    %v363 = vadd.f32 %v361, %v362
    %v364 = vrot.slane %v357, 4
    %v365 = vadd.f32 %v357, %v364
    %v366 = vrot.slane %v365, 2
    %v367 = vadd.f32 %v365, %v366
    %v368 = vrot.slane %v367, 1
    %v369 = vadd.f32 %v367, %v368
    %v370 = vmul.f32 %v363, %v170
    %v371 = vmul.f32 %v369, %v170
    %v372 = vadd.f32 %v370, 1e-05
    %v373 = vadd.f32 %v371, 1e-05
    %v374 = vrsqrt.pop %v372
    %v375 = vrsqrt.pop %v373
    %v378 = vcombine.low %v374, %v375
    %v380 = vunpack.c.l.s4 1966171168
    %v381 = vunpack.c.0.s8 %v380
    %v382 = vlaneseq
    %v383 = vshrl.u32 %v382, 7
    %v384 = vsub.s32 %v381, %v383
    %v385 = vrot.slane %v378, %v384
    %v387 = vunpack.c.l.s4 1966171168
    %v388 = vunpack.c.0.s8 %v387
    %v389 = vlaneseq
    %v390 = vshrl.u32 %v389, 7
    %v391 = vsub.s32 %v388, %v390
    %v392 = vrot.slane %v385, %v391
    %v394 = vmul.f32 %v338, %v392
    %v396 = vlaneseq
    %v397 = vshrl.u32 %v396, 7
    %v398 = vsub.s32 0, %v397
    %v399 = vrot.slane %v394, %v398
    %v400 = vlaneseq
    %v401 = vshrl.u32 %v400, 7
    %v402 = vsub.s32 1, %v401
    %v403 = vrot.slane %v394, %v402
    %v406 = vmul.f32 %v354, %v399
    %v407 = vmul.f32 %v355, %v403
    %v409 = vlaneseq
    %v410 = vshrl.u32 %v409, 7
    %v411 = vsub.s32 0, %v410
    %v412 = vrot.slane %v339, %v411
    %v413 = vlaneseq
    %v414 = vshrl.u32 %v413, 7
    %v415 = vsub.s32 1, %v414
    %v416 = vrot.slane %v339, %v415
    %v419 = vadd.f32 %v406, %v412
    %v420 = vadd.f32 %v407, %v416
    %v421 = vmul.f32 %v419, 0.2
    %v422 = vmul.f32 %v420, 0.2
    %v423 = vmax.f32 %v419, %v421
    %v424 = vmax.f32 %v420, %v422
    %v425 = vpack.c.bf16 %v423, %v423
    %v426 = vpack.c.bf16 %v424, %v424
    %v427 = vld [vmem:[#allocation10] sm:$0xff]
    %v428 = vld [vmem:[#allocation10 + $0x8] sm:$0xff]
    %v429 = vld [vmem:[#allocation10 + $0x10] sm:$0xff]
    %v430 = vld [vmem:[#allocation10 + $0x18] sm:$0xff]
    %v431 = vld [vmem:[#allocation10 + $0x20] sm:$0xff]
    %v432 = vld [vmem:[#allocation10 + $0x28] sm:$0xff]
    %v433 = vld [vmem:[#allocation10 + $0x30] sm:$0xff]
    %v434 = vld [vmem:[#allocation10 + $0x38] sm:$0xff]
    %v435 = vld [vmem:[#allocation10 + $0x40] sm:$0xff]
    %v436 = vld [vmem:[#allocation10 + $0x48] sm:$0xff]
    %v437 = vld [vmem:[#allocation10 + $0x50] sm:$0xff]
    %v438 = vld [vmem:[#allocation10 + $0x58] sm:$0xff]
    %v439 = vld [vmem:[#allocation10 + $0x60] sm:$0xff]
    %v440 = vld [vmem:[#allocation10 + $0x68] sm:$0xff]
    %v441 = vld [vmem:[#allocation10 + $0x70] sm:$0xff]
    %v442 = vld [vmem:[#allocation10 + $0x78] sm:$0xff]
    %v443 = vld [vmem:[#allocation10 + $0x80] sm:$0xff]
    %v444 = vld [vmem:[#allocation10 + $0x88] sm:$0xff]
    %v445 = vld [vmem:[#allocation10 + $0x90] sm:$0xff]
    %v446 = vld [vmem:[#allocation10 + $0x98] sm:$0xff]
    %v447 = vld [vmem:[#allocation10 + $0xa0] sm:$0xff]
    %v448 = vld [vmem:[#allocation10 + $0xa8] sm:$0xff]
    %v449 = vld [vmem:[#allocation10 + $0xb0] sm:$0xff]
    %v450 = vld [vmem:[#allocation10 + $0xb8] sm:$0xff]
    %v451 = vld [vmem:[#allocation10 + $0xc0] sm:$0xff]
    %v452 = vld [vmem:[#allocation10 + $0xc8] sm:$0xff]
    %v453 = vld [vmem:[#allocation10 + $0xd0] sm:$0xff]
    %v454 = vld [vmem:[#allocation10 + $0xd8] sm:$0xff]
    %v455 = vld [vmem:[#allocation10 + $0xe0] sm:$0xff]
    %v456 = vld [vmem:[#allocation10 + $0xe8] sm:$0xff]
    %v457 = vld [vmem:[#allocation10 + $0xf0] sm:$0xff]
    %v458 = vld [vmem:[#allocation10 + $0xf8] sm:$0xff]
    %v459 = vld [vmem:[#allocation10 + $0x100] sm:$0xff]
    %v460 = vld [vmem:[#allocation10 + $0x108] sm:$0xff]
    %v461 = vld [vmem:[#allocation10 + $0x110] sm:$0xff]
    %v462 = vld [vmem:[#allocation10 + $0x118] sm:$0xff]
    %v463 = vld [vmem:[#allocation10 + $0x120] sm:$0xff]
    %v464 = vld [vmem:[#allocation10 + $0x128] sm:$0xff]
    %v465 = vld [vmem:[#allocation10 + $0x130] sm:$0xff]
    %v466 = vld [vmem:[#allocation10 + $0x138] sm:$0xff]
    %v467 = vld [vmem:[#allocation10 + $0x140] sm:$0xff]
    %v468 = vld [vmem:[#allocation10 + $0x148] sm:$0xff]
    %v469 = vld [vmem:[#allocation10 + $0x150] sm:$0xff]
    %v470 = vld [vmem:[#allocation10 + $0x158] sm:$0xff]
    %v471 = vld [vmem:[#allocation10 + $0x160] sm:$0xff]
    %v472 = vld [vmem:[#allocation10 + $0x168] sm:$0xff]
    %v473 = vld [vmem:[#allocation10 + $0x170] sm:$0xff]
    %v474 = vld [vmem:[#allocation10 + $0x178] sm:$0xff]
    %v475 = vld [vmem:[#allocation10 + $0x180] sm:$0xff]
    %v476 = vld [vmem:[#allocation10 + $0x188] sm:$0xff]
    %v477 = vld [vmem:[#allocation10 + $0x190] sm:$0xff]
    %v478 = vld [vmem:[#allocation10 + $0x198] sm:$0xff]
    %v479 = vld [vmem:[#allocation10 + $0x1a0] sm:$0xff]
    %v480 = vld [vmem:[#allocation10 + $0x1a8] sm:$0xff]
    %v481 = vld [vmem:[#allocation10 + $0x1b0] sm:$0xff]
    %v482 = vld [vmem:[#allocation10 + $0x1b8] sm:$0xff]
    %v483 = vld [vmem:[#allocation10 + $0x1c0] sm:$0xff]
    %v484 = vld [vmem:[#allocation10 + $0x1c8] sm:$0xff]
    %v485 = vld [vmem:[#allocation10 + $0x1d0] sm:$0xff]
    %v486 = vld [vmem:[#allocation10 + $0x1d8] sm:$0xff]
    %v487 = vld [vmem:[#allocation10 + $0x1e0] sm:$0xff]
    %v488 = vld [vmem:[#allocation10 + $0x1e8] sm:$0xff]
    %v489 = vld [vmem:[#allocation10 + $0x1f0] sm:$0xff]
    %v490 = vld [vmem:[#allocation10 + $0x1f8] sm:$0xff]
    %v555 = vunpack.c.l.b16 %v427
    %v556 = vunpack.c.h.b16 %v427
    %v557 = vunpack.c.l.b16 %v428
    %v558 = vunpack.c.h.b16 %v428
    %v559 = vunpack.c.l.b16 %v429
    %v560 = vunpack.c.h.b16 %v429
    %v561 = vunpack.c.l.b16 %v430
    %v562 = vunpack.c.h.b16 %v430
    %v563 = vunpack.c.l.b16 %v431
    %v564 = vunpack.c.h.b16 %v431
    %v565 = vunpack.c.l.b16 %v432
    %v566 = vunpack.c.h.b16 %v432
    %v567 = vunpack.c.l.b16 %v433
    %v568 = vunpack.c.h.b16 %v433
    %v569 = vunpack.c.l.b16 %v434
    %v570 = vunpack.c.h.b16 %v434
    %v571 = vunpack.c.l.b16 %v435
    %v572 = vunpack.c.h.b16 %v435
    %v573 = vunpack.c.l.b16 %v436
    %v574 = vunpack.c.h.b16 %v436
    %v575 = vunpack.c.l.b16 %v437
    %v576 = vunpack.c.h.b16 %v437
    %v577 = vunpack.c.l.b16 %v438
    %v578 = vunpack.c.h.b16 %v438
    %v579 = vunpack.c.l.b16 %v439
    %v580 = vunpack.c.h.b16 %v439
    %v581 = vunpack.c.l.b16 %v440
    %v582 = vunpack.c.h.b16 %v440
    %v583 = vunpack.c.l.b16 %v441
    %v584 = vunpack.c.h.b16 %v441
    %v585 = vunpack.c.l.b16 %v442
    %v586 = vunpack.c.h.b16 %v442
    %v587 = vunpack.c.l.b16 %v443
    %v588 = vunpack.c.h.b16 %v443
    %v589 = vunpack.c.l.b16 %v444
    %v590 = vunpack.c.h.b16 %v444
    %v591 = vunpack.c.l.b16 %v445
    %v592 = vunpack.c.h.b16 %v445
    %v593 = vunpack.c.l.b16 %v446
    %v594 = vunpack.c.h.b16 %v446
    %v595 = vunpack.c.l.b16 %v447
    %v596 = vunpack.c.h.b16 %v447
    %v597 = vunpack.c.l.b16 %v448
    %v598 = vunpack.c.h.b16 %v448
    %v599 = vunpack.c.l.b16 %v449
    %v600 = vunpack.c.h.b16 %v449
    %v601 = vunpack.c.l.b16 %v450
    %v602 = vunpack.c.h.b16 %v450
    %v603 = vunpack.c.l.b16 %v451
    %v604 = vunpack.c.h.b16 %v451
    %v605 = vunpack.c.l.b16 %v452
    %v606 = vunpack.c.h.b16 %v452
    %v607 = vunpack.c.l.b16 %v453
    %v608 = vunpack.c.h.b16 %v453
    %v609 = vunpack.c.l.b16 %v454
    %v610 = vunpack.c.h.b16 %v454
    %v611 = vunpack.c.l.b16 %v455
    %v612 = vunpack.c.h.b16 %v455
    %v613 = vunpack.c.l.b16 %v456
    %v614 = vunpack.c.h.b16 %v456
    %v615 = vunpack.c.l.b16 %v457
    %v616 = vunpack.c.h.b16 %v457
    %v617 = vunpack.c.l.b16 %v458
    %v618 = vunpack.c.h.b16 %v458
    %v619 = vunpack.c.l.b16 %v459
    %v620 = vunpack.c.h.b16 %v459
    %v621 = vunpack.c.l.b16 %v460
    %v622 = vunpack.c.h.b16 %v460
    %v623 = vunpack.c.l.b16 %v461
    %v624 = vunpack.c.h.b16 %v461
    %v625 = vunpack.c.l.b16 %v462
    %v626 = vunpack.c.h.b16 %v462
    %v627 = vunpack.c.l.b16 %v463
    %v628 = vunpack.c.h.b16 %v463
    %v629 = vunpack.c.l.b16 %v464
    %v630 = vunpack.c.h.b16 %v464
    %v631 = vunpack.c.l.b16 %v465
    %v632 = vunpack.c.h.b16 %v465
    %v633 = vunpack.c.l.b16 %v466
    %v634 = vunpack.c.h.b16 %v466
    %v635 = vunpack.c.l.b16 %v467
    %v636 = vunpack.c.h.b16 %v467
    %v637 = vunpack.c.l.b16 %v468
    %v638 = vunpack.c.h.b16 %v468
    %v639 = vunpack.c.l.b16 %v469
    %v640 = vunpack.c.h.b16 %v469
    %v641 = vunpack.c.l.b16 %v470
    %v642 = vunpack.c.h.b16 %v470
    %v643 = vunpack.c.l.b16 %v471
    %v644 = vunpack.c.h.b16 %v471
    %v645 = vunpack.c.l.b16 %v472
    %v646 = vunpack.c.h.b16 %v472
    %v647 = vunpack.c.l.b16 %v473
    %v648 = vunpack.c.h.b16 %v473
    %v649 = vunpack.c.l.b16 %v474
    %v650 = vunpack.c.h.b16 %v474
    %v651 = vunpack.c.l.b16 %v475
    %v652 = vunpack.c.h.b16 %v475
    %v653 = vunpack.c.l.b16 %v476
    %v654 = vunpack.c.h.b16 %v476
    %v655 = vunpack.c.l.b16 %v477
    %v656 = vunpack.c.h.b16 %v477
    %v657 = vunpack.c.l.b16 %v478
    %v658 = vunpack.c.h.b16 %v478
    %v659 = vunpack.c.l.b16 %v479
    %v660 = vunpack.c.h.b16 %v479
    %v661 = vunpack.c.l.b16 %v480
    %v662 = vunpack.c.h.b16 %v480
    %v663 = vunpack.c.l.b16 %v481
    %v664 = vunpack.c.h.b16 %v481
    %v665 = vunpack.c.l.b16 %v482
    %v666 = vunpack.c.h.b16 %v482
    %v667 = vunpack.c.l.b16 %v483
    %v668 = vunpack.c.h.b16 %v483
    %v669 = vunpack.c.l.b16 %v484
    %v670 = vunpack.c.h.b16 %v484
    %v671 = vunpack.c.l.b16 %v485
    %v672 = vunpack.c.h.b16 %v485
    %v673 = vunpack.c.l.b16 %v486
    %v674 = vunpack.c.h.b16 %v486
    %v675 = vunpack.c.l.b16 %v487
    %v676 = vunpack.c.h.b16 %v487
    %v677 = vunpack.c.l.b16 %v488
    %v678 = vunpack.c.h.b16 %v488
    %v679 = vunpack.c.l.b16 %v489
    %v680 = vunpack.c.h.b16 %v489
    %v681 = vunpack.c.l.b16 %v490
    %v682 = vunpack.c.h.b16 %v490
    %v683 = vpack.c.b16 %v559, %v555
    %v684 = vpack.c.b16 %v560, %v556
    %v685 = vpack.c.b16 %v561, %v557
    %v686 = vpack.c.b16 %v562, %v558
    %v687 = vpack.c.b16 %v567, %v563
    %v688 = vpack.c.b16 %v568, %v564
    %v689 = vpack.c.b16 %v569, %v565
    %v690 = vpack.c.b16 %v570, %v566
    %v691 = vpack.c.b16 %v575, %v571
    %v692 = vpack.c.b16 %v576, %v572
    %v693 = vpack.c.b16 %v577, %v573
    %v694 = vpack.c.b16 %v578, %v574
    %v695 = vpack.c.b16 %v583, %v579
    %v696 = vpack.c.b16 %v584, %v580
    %v697 = vpack.c.b16 %v585, %v581
    %v698 = vpack.c.b16 %v586, %v582
    %v699 = vpack.c.b16 %v591, %v587
    %v700 = vpack.c.b16 %v592, %v588
    %v701 = vpack.c.b16 %v593, %v589
    %v702 = vpack.c.b16 %v594, %v590
    %v703 = vpack.c.b16 %v599, %v595
    %v704 = vpack.c.b16 %v600, %v596
    %v705 = vpack.c.b16 %v601, %v597
    %v706 = vpack.c.b16 %v602, %v598
    %v707 = vpack.c.b16 %v607, %v603
    %v708 = vpack.c.b16 %v608, %v604
    %v709 = vpack.c.b16 %v609, %v605
    %v710 = vpack.c.b16 %v610, %v606
    %v711 = vpack.c.b16 %v615, %v611
    %v712 = vpack.c.b16 %v616, %v612
    %v713 = vpack.c.b16 %v617, %v613
    %v714 = vpack.c.b16 %v618, %v614
    %v715 = vpack.c.b16 %v623, %v619
    %v716 = vpack.c.b16 %v624, %v620
    %v717 = vpack.c.b16 %v625, %v621
    %v718 = vpack.c.b16 %v626, %v622
    %v719 = vpack.c.b16 %v631, %v627
    %v720 = vpack.c.b16 %v632, %v628
    %v721 = vpack.c.b16 %v633, %v629
    %v722 = vpack.c.b16 %v634, %v630
    %v723 = vpack.c.b16 %v639, %v635
    %v724 = vpack.c.b16 %v640, %v636
    %v725 = vpack.c.b16 %v641, %v637
    %v726 = vpack.c.b16 %v642, %v638
    %v727 = vpack.c.b16 %v647, %v643
    %v728 = vpack.c.b16 %v648, %v644
    %v729 = vpack.c.b16 %v649, %v645
    %v730 = vpack.c.b16 %v650, %v646
    %v731 = vpack.c.b16 %v655, %v651
    %v732 = vpack.c.b16 %v656, %v652
    %v733 = vpack.c.b16 %v657, %v653
    %v734 = vpack.c.b16 %v658, %v654
    %v735 = vpack.c.b16 %v663, %v659
    %v736 = vpack.c.b16 %v664, %v660
    %v737 = vpack.c.b16 %v665, %v661
    %v738 = vpack.c.b16 %v666, %v662
    %v739 = vpack.c.b16 %v671, %v667
    %v740 = vpack.c.b16 %v672, %v668
    %v741 = vpack.c.b16 %v673, %v669
    %v742 = vpack.c.b16 %v674, %v670
    %v743 = vpack.c.b16 %v679, %v675
    %v744 = vpack.c.b16 %v680, %v676
    %v745 = vpack.c.b16 %v681, %v677
    %v746 = vpack.c.b16 %v682, %v678
    %811 = vmatprep.subr.bf16.mxu0 %v684
    %812 = vmatpush1.bf16.msra.mxu0 %v683
    %813 = vmatprep.subr.bf16.mxu0 %v688
    %814 = vmatpush1.bf16.msra.mxu0 %v687
    %815 = vmatprep.subr.bf16.mxu0 %v692
    %816 = vmatpush1.bf16.msra.mxu0 %v691
    %817 = vmatprep.subr.bf16.mxu0 %v696
    %818 = vmatpush1.bf16.msra.mxu0 %v695
    %819 = vmatprep.subr.bf16.mxu0 %v700
    %820 = vmatpush1.bf16.msra.mxu0 %v699
    %821 = vmatprep.subr.bf16.mxu0 %v704
    %822 = vmatpush1.bf16.msra.mxu0 %v703
    %823 = vmatprep.subr.bf16.mxu0 %v708
    %824 = vmatpush1.bf16.msra.mxu0 %v707
    %825 = vmatprep.subr.bf16.mxu0 %v712
    %826 = vmatpush1.bf16.msra.mxu0 %v711
    %827 = vmatprep.subr.bf16.mxu0 %v716
    %828 = vmatpush1.bf16.msra.mxu0 %v715
    %829 = vmatprep.subr.bf16.mxu0 %v720
    %830 = vmatpush1.bf16.msra.mxu0 %v719
    %831 = vmatprep.subr.bf16.mxu0 %v724
    %832 = vmatpush1.bf16.msra.mxu0 %v723
    %833 = vmatprep.subr.bf16.mxu0 %v728
    %834 = vmatpush1.bf16.msra.mxu0 %v727
    %835 = vmatprep.subr.bf16.mxu0 %v732
    %836 = vmatpush1.bf16.msra.mxu0 %v731
    %837 = vmatprep.subr.bf16.mxu0 %v736
    %838 = vmatpush1.bf16.msra.mxu0 %v735
    %839 = vmatprep.subr.bf16.mxu0 %v740
    %840 = vmatpush1.bf16.msra.mxu0 %v739
    %841 = vmatprep.subr.bf16.mxu0 %v744
    %842 = vmatpush1.bf16.msra.mxu0 %v743
    %843 = vmatprep.mubr.bf16.mxu0 %v426
    %844 = vmatmul.mubr.bf16.gmra.mrb[0].mxu0 %v425
    %v845 = vpop.f32.mrb[0].mxu0
    %v846 = vadd.f32 0.0, %v845
    %v847 = vpop.f32.mrb[0].mxu0
    %v848 = vadd.f32 0.0, %v847
    %v849 = vpop.f32.mrb[0].mxu0
    %v850 = vpop.f32.mrb[0].mxu0
    %851 = vdwg.mxu0
    %852 = vmatprep.subr.bf16.mxu0 %v686
    %853 = vmatpush1.bf16.msra.mxu0 %v685
    %854 = vmatprep.subr.bf16.mxu0 %v690
    %855 = vmatpush1.bf16.msra.mxu0 %v689
    %856 = vmatprep.subr.bf16.mxu0 %v694
    %857 = vmatpush1.bf16.msra.mxu0 %v693
    %858 = vmatprep.subr.bf16.mxu0 %v698
    %859 = vmatpush1.bf16.msra.mxu0 %v697
    %860 = vmatprep.subr.bf16.mxu0 %v702
    %861 = vmatpush1.bf16.msra.mxu0 %v701
    %862 = vmatprep.subr.bf16.mxu0 %v706
    %863 = vmatpush1.bf16.msra.mxu0 %v705
    %864 = vmatprep.subr.bf16.mxu0 %v710
    %865 = vmatpush1.bf16.msra.mxu0 %v709
    %866 = vmatprep.subr.bf16.mxu0 %v714
    %867 = vmatpush1.bf16.msra.mxu0 %v713
    %868 = vmatprep.subr.bf16.mxu0 %v718
    %869 = vmatpush1.bf16.msra.mxu0 %v717
    %870 = vmatprep.subr.bf16.mxu0 %v722
    %871 = vmatpush1.bf16.msra.mxu0 %v721
    %872 = vmatprep.subr.bf16.mxu0 %v726
    %873 = vmatpush1.bf16.msra.mxu0 %v725
    %874 = vmatprep.subr.bf16.mxu0 %v730
    %875 = vmatpush1.bf16.msra.mxu0 %v729
    %876 = vmatprep.subr.bf16.mxu0 %v734
    %877 = vmatpush1.bf16.msra.mxu0 %v733
    %878 = vmatprep.subr.bf16.mxu0 %v738
    %879 = vmatpush1.bf16.msra.mxu0 %v737
    %880 = vmatprep.subr.bf16.mxu0 %v742
    %881 = vmatpush1.bf16.msra.mxu0 %v741
    %882 = vmatprep.subr.bf16.mxu0 %v746
    %883 = vmatpush1.bf16.msra.mxu0 %v745
    %884 = vmatprep.mubr.bf16.mxu0 %v426
    %885 = vmatmul.mubr.bf16.gmra.mrb[0].mxu0 %v425
    %v886 = vpop.f32.mrb[0].mxu0
    %v887 = vadd.f32 0.0, %v886
    %v888 = vpop.f32.mrb[0].mxu0
    %v889 = vadd.f32 0.0, %v888
    %v890 = vpop.f32.mrb[0].mxu0
    %v891 = vpop.f32.mrb[0].mxu0
    %892 = vdwg.mxu0
    %v893 = vld [vmem:[%s8] sm:$0xf]
    %v894 = vld [vmem:[%s9] sm:$0xf]
    %v895 = vrot.slane %v846, 4
    %v896 = vadd.f32 %v846, %v895
    %v897 = vrot.slane %v896, 2
    %v898 = vadd.f32 %v896, %v897
    %v899 = vrot.slane %v898, 1
    %v900 = vadd.f32 %v898, %v899
    %v901 = vrot.slane %v848, 4
    %v902 = vadd.f32 %v848, %v901
    %v903 = vrot.slane %v902, 2
    %v904 = vadd.f32 %v902, %v903
    %v905 = vrot.slane %v904, 1
    %v906 = vadd.f32 %v904, %v905
    %v907 = vrot.slane %v887, 4
    %v908 = vadd.f32 %v887, %v907
    %v909 = vrot.slane %v908, 2
    %v910 = vadd.f32 %v908, %v909
    %v911 = vrot.slane %v910, 1
    %v912 = vadd.f32 %v910, %v911
    %v913 = vrot.slane %v889, 4
    %v914 = vadd.f32 %v889, %v913
    %v915 = vrot.slane %v914, 2
    %v916 = vadd.f32 %v914, %v915
    %v917 = vrot.slane %v916, 1
    %v918 = vadd.f32 %v916, %v917
    %v919 = vmul.f32 %v900, %v170
    %v920 = vmul.f32 %v906, %v170
    %v921 = vmul.f32 %v912, %v170
    %v922 = vmul.f32 %v918, %v170
    %v923 = vsub.f32 %v846, %v919
    %v924 = vsub.f32 %v848, %v920
    %v925 = vsub.f32 %v887, %v921
    %v926 = vsub.f32 %v889, %v922
    %v927 = vmul.f32 %v923, %v923
    %v928 = vmul.f32 %v924, %v924
    %v929 = vmul.f32 %v925, %v925
    %v930 = vmul.f32 %v926, %v926
    %v931 = vrot.slane %v927, 4
    %v932 = vadd.f32 %v927, %v931
    %v933 = vrot.slane %v932, 2
    %v934 = vadd.f32 %v932, %v933
    %v935 = vrot.slane %v934, 1
    %v936 = vadd.f32 %v934, %v935
    %v937 = vrot.slane %v928, 4
    %v938 = vadd.f32 %v928, %v937
    %v939 = vrot.slane %v938, 2
    %v940 = vadd.f32 %v938, %v939
    %v941 = vrot.slane %v940, 1
    %v942 = vadd.f32 %v940, %v941
    %v943 = vrot.slane %v929, 4
    %v944 = vadd.f32 %v929, %v943
    %v945 = vrot.slane %v944, 2
    %v946 = vadd.f32 %v944, %v945
    %v947 = vrot.slane %v946, 1
    %v948 = vadd.f32 %v946, %v947
    %v949 = vrot.slane %v930, 4
    %v950 = vadd.f32 %v930, %v949
    %v951 = vrot.slane %v950, 2
    %v952 = vadd.f32 %v950, %v951
    %v953 = vrot.slane %v952, 1
    %v954 = vadd.f32 %v952, %v953
    %v955 = vmul.f32 %v936, %v170
    %v956 = vmul.f32 %v942, %v170
    %v957 = vmul.f32 %v948, %v170
    %v958 = vmul.f32 %v954, %v170
    %v959 = vadd.f32 %v955, 1e-05
    %v960 = vadd.f32 %v956, 1e-05
    %v961 = vadd.f32 %v957, 1e-05
    %v962 = vadd.f32 %v958, 1e-05
    %v963 = vrsqrt.pop %v959
    %v964 = vrsqrt.pop %v960
    %v965 = vrsqrt.pop %v961
    %v966 = vrsqrt.pop %v962
    %v971 = vcombine.low %v963, %v964
    %v972 = vcombine.low %v965, %v966
    %v974 = vunpack.c.l.s4 1966171168
    %v975 = vunpack.c.0.s8 %v974
    %v976 = vlaneseq
    %v977 = vshrl.u32 %v976, 7
    %v978 = vsub.s32 %v975, %v977
    %v979 = vrot.slane %v971, %v978
    %v981 = vunpack.c.l.s4 1966171168
    %v982 = vunpack.c.0.s8 %v981
    %v983 = vlaneseq
    %v984 = vshrl.u32 %v983, 7
    %v985 = vsub.s32 %v982, %v984
    %v986 = vrot.slane %v972, %v985
    %v987 = vcombine.low %v979, %v986
    %v989 = vunpack.c.l.s4 1966171168
    %v990 = vunpack.c.0.s8 %v989
    %v991 = vlaneseq
    %v992 = vshrl.u32 %v991, 7
    %v993 = vsub.s32 %v990, %v992
    %v994 = vrot.slane %v987, %v993
    %v996 = vmul.f32 %v893, %v994
    %v998 = vlaneseq
    %v999 = vshrl.u32 %v998, 7
    %v1000 = vsub.s32 0, %v999
    %v1001 = vrot.slane %v996, %v1000
    %v1002 = vlaneseq
    %v1003 = vshrl.u32 %v1002, 7
    %v1004 = vsub.s32 1, %v1003
    %v1005 = vrot.slane %v996, %v1004
    %v1006 = vlaneseq
    %v1007 = vshrl.u32 %v1006, 7
    %v1008 = vsub.s32 2, %v1007
    %v1009 = vrot.slane %v996, %v1008
    %v1010 = vlaneseq
    %v1011 = vshrl.u32 %v1010, 7
    %v1012 = vsub.s32 3, %v1011
    %v1013 = vrot.slane %v996, %v1012
    %v1018 = vmul.f32 %v923, %v1001
    %v1019 = vmul.f32 %v924, %v1005
    %v1020 = vmul.f32 %v925, %v1009
    %v1021 = vmul.f32 %v926, %v1013
    %v1023 = vlaneseq
    %v1024 = vshrl.u32 %v1023, 7
    %v1025 = vsub.s32 0, %v1024
    %v1026 = vrot.slane %v894, %v1025
    %v1027 = vlaneseq
    %v1028 = vshrl.u32 %v1027, 7
    %v1029 = vsub.s32 1, %v1028
    %v1030 = vrot.slane %v894, %v1029
    %v1031 = vlaneseq
    %v1032 = vshrl.u32 %v1031, 7
    %v1033 = vsub.s32 2, %v1032
    %v1034 = vrot.slane %v894, %v1033
    %v1035 = vlaneseq
    %v1036 = vshrl.u32 %v1035, 7
    %v1037 = vsub.s32 3, %v1036
    %v1038 = vrot.slane %v894, %v1037
    %v1043 = vadd.f32 %v1018, %v1026
    %v1044 = vadd.f32 %v1019, %v1030
    %v1045 = vadd.f32 %v1020, %v1034
    %v1046 = vadd.f32 %v1021, %v1038
    %v1047 = vmul.f32 %v1043, 0.2
    %v1048 = vmul.f32 %v1044, 0.2
    %v1049 = vmul.f32 %v1045, 0.2
    %v1050 = vmul.f32 %v1046, 0.2
    %v1051 = vmax.f32 %v1043, %v1047
    %v1052 = vmax.f32 %v1044, %v1048
    %v1053 = vmax.f32 %v1045, %v1049
    %v1054 = vmax.f32 %v1046, %v1050
    %1055 = vst [vmem:[#allocation11] sm:$0xff] %v1051
    %1056 = vst [vmem:[#allocation11 + $0x8] sm:$0xff] %v1052
    %1057 = vst [vmem:[#allocation11 + $0x10] sm:$0xff] %v1053
    %1058 = vst [vmem:[#allocation11 + $0x18] sm:$0xff] %v1054
    // Predicated region
    $region62: #{tpu_custom_call.1} parent=1 // pred_check
      _
    $region63: #{tpu_custom_call.1} parent=1 // pred_check_branch
      %1060 = sbr.rel (0) target = $region65
    $region64: #{tpu_custom_call.1} parent=1 // pred_region
      %s1062 = ssub.s32 512, 512
      %1063 = vsyncadd [#allocation4], %s1062
      %s1065 = sshll.u32 [#allocation11], 4
      %s1066 = int_to_ptr.vmem [resolvable:$true] %s1065
      %1068 = dma.vmem_to_hbm [thread:$0]  %s1066, 512, %s10, [#allocation4]
    $region65: #{tpu_custom_call.1} parent=1 // pred_fallthru
      _
    // Predicated region
    $region66: #{tpu_custom_call.1} parent=1 // pred_check
      _
    $region67: #{tpu_custom_call.1} parent=1 // pred_check_branch
      %1070 = sbr.rel (0) target = $region69
    $region68: #{tpu_custom_call.1} parent=1 // pred_region
      %1071 = dma.done [#allocation4], 512
    $region69: #{tpu_custom_call.1} parent=1 // pred_fallthru
      _
    %1072 = vsyncpa [#allocation3], 1
    %1073 = vsyncpa [#allocation6], 1
    %1074 = vsyncpa [#allocation9], 1
    %1075 = vsyncpa [#allocation4], 1

</llo_original>
